<compile_context>
chip_gen: v7x
topology: tpu7x:2x2x1
jax: 0.10.0
libtpu: 0.0.40
codegen_flags: <defaults>
</compile_context>

<pallas_src>
import jax
import jax.numpy as jnp
from jax.experimental import pallas as pl
from jax.experimental.pallas import tpu as pltpu


def mixture_kernel(w_ref, b_ref, h_ref, sel_ref, gen_ref, bmap_ref, out_ref):
    """One batch tile of the Mixture forward pass.

    w_ref:    (1, H)       Linear weight row (lane-dense), VMEM
    b_ref:    (1,)         Linear bias, SMEM
    h_ref:    (TB, H)      state[0].squeeze(1) batch tile
    sel_ref:  (TB, Ns)     selector_action tile (native dtype)
    gen_ref:  (TB, Ng)     generator_action tile (native dtype)
    bmap_ref: (TB, Ns*M)   b_map tile, lane-dense flattened (native dtype)
    out_ref:  (TB, Ng+M)   [generator | mixed selector]
    """
    ns = sel_ref.shape[1]
    ng = gen_ref.shape[1]
    m = bmap_ref.shape[1] // ns

    # Linear(H -> 1) as a VPU multiply + one lane reduce (a 1-column MXU matmul
    # would waste 127/128 of the MXU output path).
    h = h_ref[...].astype(jnp.float32)                       # (TB, H)
    w = w_ref[...].astype(jnp.float32)                       # (1, H)
    logit = jnp.sum(h * w, axis=1, keepdims=True) + b_ref[0]
    # sigmoid(x) == 0.5 * tanh(0.5 * x) + 0.5 : a single EUP transcendental.
    p_s_g = 0.5 * jnp.tanh(0.5 * logit) + 0.5                # (TB, 1)

    # Numerically-stable softmax(dim=1) on each action head (exact division).
    sel = sel_ref[...].astype(jnp.float32)                   # (TB, Ns)
    sel = jnp.exp(sel - jnp.max(sel, axis=1, keepdims=True))
    sel = sel / jnp.sum(sel, axis=1, keepdims=True)

    gen = gen_ref[...].astype(jnp.float32)                   # (TB, Ng)
    gen = jnp.exp(gen - jnp.max(gen, axis=1, keepdims=True))
    gen = gen / jnp.sum(gen, axis=1, keepdims=True)
    gen = gen * p_s_g                                        # gate generator head

    # bmm((TB,1,Ns), (TB,Ns,M)) on the lane-dense flattened b_map: unroll the
    # Ns contraction as static lane-block multiply-adds (no (TB,Ns,M) sublane
    # reduce, no lane-padded b_map block).
    bmap = bmap_ref[...].astype(jnp.float32)                 # (TB, Ns*M)
    mixed = sel[:, 0:1] * bmap[:, 0:m]
    for s in range(1, ns):
        mixed = mixed + sel[:, s:s + 1] * bmap[:, s * m:(s + 1) * m]
    mixed = mixed * (1.0 - p_s_g)                            # (TB, M)

    # Two static slice stores into the single output block (no in-kernel concat).
    out_ref[:, :ng] = gen.astype(out_ref.dtype)
    out_ref[:, ng:] = mixed.astype(out_ref.dtype)


def _choose_batch_tile(batch, tile_b):
    """Full batch when tiny; otherwise a sublane-aligned tile giving the grid at
    least two steps so both v7x TensorCores get work on the parallel axis."""
    if batch <= 8:
        return batch
    half = ((pl.cdiv(batch, 2) + 7) // 8) * 8
    return max(8, min(tile_b, half))


def mixture_forward(state, weight, bias, selector_action, generator_action,
                    b_map, *, tile_b=2048):
    """Forward pass of `Mixture`.

    state:            tuple; state[0] has shape (B, 1, H) (LSTM-style hidden)
    weight, bias:     nn.Linear(H, 1) parameters, shapes (1, H) and (1,)
    selector_action:  (B, Ns)
    generator_action: (B, Ng)
    b_map:            (B, Ns, M)
    returns:          (B, Ng + M) float32
    """
    h = jnp.squeeze(state[0], axis=1)                        # (B, H)
    B, H = h.shape
    ns = selector_action.shape[1]
    ng = generator_action.shape[1]
    m = b_map.shape[2]

    # Free row-major metadata reshape -> lane-dense block for the dominant stream.
    bmap_flat = b_map.reshape(B, ns * m)                     # (B, Ns*M)
    bias = bias.reshape(1).astype(jnp.float32)               # SMEM scalar

    tb = _choose_batch_tile(B, tile_b)
    n_steps = pl.cdiv(B, tb)

    # Dominant-stream b_map gets a third buffer once the grid actually pipelines.
    if n_steps > 1:
        bmap_spec = pl.BlockSpec((tb, ns * m), lambda i: (i, 0),
                                 pipeline_mode=pl.Buffered(3))
    else:
        bmap_spec = pl.BlockSpec((tb, ns * m), lambda i: (i, 0))

    # Explicit VMEM budget: double-buffered blocks (+1 extra b_map buffer) plus
    # headroom, clamped well inside v7x's 64 MiB physical VMEM.
    block_bytes = 4 * tb * (H + ns + ng + ns * m + ng + m)
    vmem_limit = int(min(32 * 1024 * 1024, max(16 * 1024 * 1024, 4 * block_bytes)))

    return pl.pallas_call(
        mixture_kernel,
        out_shape=jax.ShapeDtypeStruct((B, ng + m), jnp.float32),
        grid=(n_steps,),
        in_specs=[
            pl.BlockSpec((1, H), lambda i: (0, 0)),                   # weight
            pl.BlockSpec(memory_space=pltpu.MemorySpace.SMEM),        # bias
            pl.BlockSpec((tb, H), lambda i: (i, 0)),                  # h
            pl.BlockSpec((tb, ns), lambda i: (i, 0)),                 # selector
            pl.BlockSpec((tb, ng), lambda i: (i, 0)),                 # generator
            bmap_spec,                                                # b_map (flat)
        ],
        out_specs=pl.BlockSpec((tb, ng + m), lambda i: (i, 0)),
        compiler_params=pltpu.CompilerParams(
            dimension_semantics=("parallel",),
            vmem_limit_bytes=vmem_limit),
    )(weight, bias, h, selector_action, generator_action, bmap_flat)


def mixture_reference(state, weight, bias, selector_action, generator_action,
                      b_map):
    """Pure-JAX reference of the PyTorch forward, for correctness checking."""
    h = jnp.squeeze(state[0], axis=1).astype(jnp.float32)
    p = jax.nn.sigmoid(h @ weight.astype(jnp.float32).T + bias.astype(jnp.float32))
    sel = jax.nn.softmax(selector_action.astype(jnp.float32), axis=1)
    gen = jax.nn.softmax(generator_action.astype(jnp.float32), axis=1) * p
    mixed = jnp.einsum("bs,bsm->bm", sel, b_map.astype(jnp.float32)) * (1.0 - p)
    return jnp.concatenate([gen, mixed], axis=1)


if __name__ == "__main__":
    key = jax.random.PRNGKey(0)
    B, H, NS, NG, M = 2, 32, 8, 16, 16
    ks = jax.random.split(key, 7)

    # state is an (h, c)-style tuple in the original model; h has shape (B, 1, H).
    state = (jax.random.normal(ks[0], (B, 1, H), jnp.float32),
             jax.random.normal(ks[1], (B, 1, H), jnp.float32))
    selector_action = jax.random.normal(ks[2], (B, NS), jnp.float32)
    generator_action = jax.random.normal(ks[3], (B, NG), jnp.float32)
    b_map = jax.random.normal(ks[4], (B, NS, M), jnp.float32)

    # nn.Linear(state_size, 1) parameters in PyTorch layout: weight (1, H), bias (1,).
    bound = 1.0 / jnp.sqrt(jnp.float32(H))
    weight = jax.random.uniform(ks[5], (1, H), jnp.float32, -bound, bound)
    bias = jax.random.uniform(ks[6], (1,), jnp.float32, -bound, bound)

    out = mixture_forward(state, weight, bias, selector_action,
                          generator_action, b_map)
    out = jax.block_until_ready(out)

    ref = mixture_reference(state, weight, bias, selector_action,
                            generator_action, b_map)
    assert out.shape == (B, NG + M)
    assert bool(jnp.allclose(out, ref, rtol=1e-5, atol=1e-5)), (
        "max abs err = %g" % float(jnp.max(jnp.abs(out - ref))))
    print("KERNEL_OK")
</pallas_src>

<mosaic_0001>
module attributes {stable_mosaic.version = 11 : i64} {
  func.func @mixture_kernel(%arg0: i32, %arg1: memref<1x32xf32, #tpu.memory_space<vmem>>, %arg2: memref<1xf32, #tpu.memory_space<smem>>, %arg3: memref<2x32xf32, #tpu.memory_space<vmem>>, %arg4: memref<2x8xf32, #tpu.memory_space<vmem>>, %arg5: memref<2x16xf32, #tpu.memory_space<vmem>>, %arg6: memref<2x128xf32, #tpu.memory_space<vmem>>, %arg7: memref<2x32xf32, #tpu.memory_space<vmem>>) attributes {dimension_semantics = [#tpu.dimension_semantics<parallel>], iteration_bounds = array<i64: 1>, scalar_prefetch = 0 : i64, scratch_operands = 0 : i64, tpu.core_type = #tpu.core_type<tc>, window_params = [{pipeline_mode = #tpu.pipeline_mode<synchronous>, transform_indices = @transform_0, window_bounds = array<i64: 1, 32>}, {transform_indices = @transform_1, window_bounds = array<i64: 1>}, {transform_indices = @transform_2, window_bounds = array<i64: 2, 32>}, {transform_indices = @transform_3, window_bounds = array<i64: 2, 8>}, {transform_indices = @transform_4, window_bounds = array<i64: 2, 16>}, {transform_indices = @transform_5, window_bounds = array<i64: 2, 128>}, {transform_indices = @transform_6, window_bounds = array<i64: 2, 32>}]} {
    %c0 = arith.constant 0 : index
    %c0_0 = arith.constant 0 : index
    %0 = vector.load %arg3[%c0, %c0_0] : memref<2x32xf32, #tpu.memory_space<vmem>>, vector<2x32xf32>
    %c0_1 = arith.constant 0 : index
    %c0_2 = arith.constant 0 : index
    %1 = vector.load %arg1[%c0_1, %c0_2] : memref<1x32xf32, #tpu.memory_space<vmem>>, vector<1x32xf32>
    %2 = vector.broadcast %1 : vector<1x32xf32> to vector<2x32xf32>
    %3 = arith.mulf %0, %2 : vector<2x32xf32>
    %cst = arith.constant dense<0.000000e+00> : vector<2xf32>
    %4 = vector.multi_reduction <add>, %3, %cst [1] : vector<2x32xf32> to vector<2xf32>
    %5 = vector.shape_cast %4 : vector<2xf32> to vector<2x1xf32>
    %c0_3 = arith.constant 0 : index
    %6 = memref.load %arg2[%c0_3] : memref<1xf32, #tpu.memory_space<smem>>
    %7 = vector.broadcast %6 : f32 to vector<2x1xf32>
    %8 = arith.addf %5, %7 : vector<2x1xf32>
    %cst_4 = arith.constant 5.000000e-01 : f32
    %9 = vector.broadcast %cst_4 : f32 to vector<2x1xf32>
    %10 = arith.mulf %9, %8 : vector<2x1xf32>
    %11 = math.tanh %10 : vector<2x1xf32>
    %cst_5 = arith.constant 5.000000e-01 : f32
    %12 = vector.broadcast %cst_5 : f32 to vector<2x1xf32>
    %13 = arith.mulf %12, %11 : vector<2x1xf32>
    %cst_6 = arith.constant 5.000000e-01 : f32
    %14 = vector.broadcast %cst_6 : f32 to vector<2x1xf32>
    %15 = arith.addf %13, %14 : vector<2x1xf32>
    %c0_7 = arith.constant 0 : index
    %c0_8 = arith.constant 0 : index
    %16 = vector.load %arg4[%c0_7, %c0_8] : memref<2x8xf32, #tpu.memory_space<vmem>>, vector<2x8xf32>
    %cst_9 = arith.constant dense<0xFF800000> : vector<2xf32>
    %17 = vector.multi_reduction <maximumf>, %16, %cst_9 [1] : vector<2x8xf32> to vector<2xf32>
    %18 = vector.shape_cast %17 : vector<2xf32> to vector<2x1xf32>
    %19 = vector.broadcast %18 : vector<2x1xf32> to vector<2x8xf32>
    %20 = arith.subf %16, %19 : vector<2x8xf32>
    %21 = math.exp %20 : vector<2x8xf32>
    %cst_10 = arith.constant dense<0.000000e+00> : vector<2xf32>
    %22 = vector.multi_reduction <add>, %21, %cst_10 [1] : vector<2x8xf32> to vector<2xf32>
    %23 = vector.shape_cast %22 : vector<2xf32> to vector<2x1xf32>
    %24 = vector.broadcast %23 : vector<2x1xf32> to vector<2x8xf32>
    %25 = arith.divf %21, %24 : vector<2x8xf32>
    %c0_11 = arith.constant 0 : index
    %c0_12 = arith.constant 0 : index
    %26 = vector.load %arg5[%c0_11, %c0_12] : memref<2x16xf32, #tpu.memory_space<vmem>>, vector<2x16xf32>
    %cst_13 = arith.constant dense<0xFF800000> : vector<2xf32>
    %27 = vector.multi_reduction <maximumf>, %26, %cst_13 [1] : vector<2x16xf32> to vector<2xf32>
    %28 = vector.shape_cast %27 : vector<2xf32> to vector<2x1xf32>
    %29 = vector.broadcast %28 : vector<2x1xf32> to vector<2x16xf32>
    %30 = arith.subf %26, %29 : vector<2x16xf32>
    %31 = math.exp %30 : vector<2x16xf32>
    %cst_14 = arith.constant dense<0.000000e+00> : vector<2xf32>
    %32 = vector.multi_reduction <add>, %31, %cst_14 [1] : vector<2x16xf32> to vector<2xf32>
    %33 = vector.shape_cast %32 : vector<2xf32> to vector<2x1xf32>
    %34 = vector.broadcast %33 : vector<2x1xf32> to vector<2x16xf32>
    %35 = arith.divf %31, %34 : vector<2x16xf32>
    %36 = vector.broadcast %15 : vector<2x1xf32> to vector<2x16xf32>
    %37 = arith.mulf %35, %36 : vector<2x16xf32>
    %c0_15 = arith.constant 0 : index
    %c0_16 = arith.constant 0 : index
    %38 = vector.load %arg6[%c0_15, %c0_16] : memref<2x128xf32, #tpu.memory_space<vmem>>, vector<2x128xf32>
    %39 = vector.extract_strided_slice %25 {offsets = [0, 0], sizes = [2, 1], strides = [1, 1]} : vector<2x8xf32> to vector<2x1xf32>
    %40 = vector.extract_strided_slice %38 {offsets = [0, 0], sizes = [2, 16], strides = [1, 1]} : vector<2x128xf32> to vector<2x16xf32>
    %41 = vector.broadcast %39 : vector<2x1xf32> to vector<2x16xf32>
    %42 = arith.mulf %41, %40 : vector<2x16xf32>
    %43 = vector.extract_strided_slice %25 {offsets = [0, 1], sizes = [2, 1], strides = [1, 1]} : vector<2x8xf32> to vector<2x1xf32>
    %44 = vector.extract_strided_slice %38 {offsets = [0, 16], sizes = [2, 16], strides = [1, 1]} : vector<2x128xf32> to vector<2x16xf32>
    %45 = vector.broadcast %43 : vector<2x1xf32> to vector<2x16xf32>
    %46 = arith.mulf %45, %44 : vector<2x16xf32>
    %47 = arith.addf %42, %46 : vector<2x16xf32>
    %48 = vector.extract_strided_slice %25 {offsets = [0, 2], sizes = [2, 1], strides = [1, 1]} : vector<2x8xf32> to vector<2x1xf32>
    %49 = vector.extract_strided_slice %38 {offsets = [0, 32], sizes = [2, 16], strides = [1, 1]} : vector<2x128xf32> to vector<2x16xf32>
    %50 = vector.broadcast %48 : vector<2x1xf32> to vector<2x16xf32>
    %51 = arith.mulf %50, %49 : vector<2x16xf32>
    %52 = arith.addf %47, %51 : vector<2x16xf32>
    %53 = vector.extract_strided_slice %25 {offsets = [0, 3], sizes = [2, 1], strides = [1, 1]} : vector<2x8xf32> to vector<2x1xf32>
    %54 = vector.extract_strided_slice %38 {offsets = [0, 48], sizes = [2, 16], strides = [1, 1]} : vector<2x128xf32> to vector<2x16xf32>
    %55 = vector.broadcast %53 : vector<2x1xf32> to vector<2x16xf32>
    %56 = arith.mulf %55, %54 : vector<2x16xf32>
    %57 = arith.addf %52, %56 : vector<2x16xf32>
    %58 = vector.extract_strided_slice %25 {offsets = [0, 4], sizes = [2, 1], strides = [1, 1]} : vector<2x8xf32> to vector<2x1xf32>
    %59 = vector.extract_strided_slice %38 {offsets = [0, 64], sizes = [2, 16], strides = [1, 1]} : vector<2x128xf32> to vector<2x16xf32>
    %60 = vector.broadcast %58 : vector<2x1xf32> to vector<2x16xf32>
    %61 = arith.mulf %60, %59 : vector<2x16xf32>
    %62 = arith.addf %57, %61 : vector<2x16xf32>
    %63 = vector.extract_strided_slice %25 {offsets = [0, 5], sizes = [2, 1], strides = [1, 1]} : vector<2x8xf32> to vector<2x1xf32>
    %64 = vector.extract_strided_slice %38 {offsets = [0, 80], sizes = [2, 16], strides = [1, 1]} : vector<2x128xf32> to vector<2x16xf32>
    %65 = vector.broadcast %63 : vector<2x1xf32> to vector<2x16xf32>
    %66 = arith.mulf %65, %64 : vector<2x16xf32>
    %67 = arith.addf %62, %66 : vector<2x16xf32>
    %68 = vector.extract_strided_slice %25 {offsets = [0, 6], sizes = [2, 1], strides = [1, 1]} : vector<2x8xf32> to vector<2x1xf32>
    %69 = vector.extract_strided_slice %38 {offsets = [0, 96], sizes = [2, 16], strides = [1, 1]} : vector<2x128xf32> to vector<2x16xf32>
    %70 = vector.broadcast %68 : vector<2x1xf32> to vector<2x16xf32>
    %71 = arith.mulf %70, %69 : vector<2x16xf32>
    %72 = arith.addf %67, %71 : vector<2x16xf32>
    %73 = vector.extract_strided_slice %25 {offsets = [0, 7], sizes = [2, 1], strides = [1, 1]} : vector<2x8xf32> to vector<2x1xf32>
    %74 = vector.extract_strided_slice %38 {offsets = [0, 112], sizes = [2, 16], strides = [1, 1]} : vector<2x128xf32> to vector<2x16xf32>
    %75 = vector.broadcast %73 : vector<2x1xf32> to vector<2x16xf32>
    %76 = arith.mulf %75, %74 : vector<2x16xf32>
    %77 = arith.addf %72, %76 : vector<2x16xf32>
    %cst_17 = arith.constant 1.000000e+00 : f32
    %78 = vector.broadcast %cst_17 : f32 to vector<2x1xf32>
    %79 = arith.subf %78, %15 : vector<2x1xf32>
    %80 = vector.broadcast %79 : vector<2x1xf32> to vector<2x16xf32>
    %81 = arith.mulf %77, %80 : vector<2x16xf32>
    %c0_18 = arith.constant 0 : index
    %c0_19 = arith.constant 0 : index
    %82 = vector.load %arg7[%c0_18, %c0_19] : memref<2x32xf32, #tpu.memory_space<vmem>>, vector<2x16xf32>
    tpu.vector_store %arg7[%c0_18, %c0_19], %37 {strides = array<i32>} : memref<2x32xf32, #tpu.memory_space<vmem>>, vector<2x16xf32>,
    %c0_20 = arith.constant 0 : index
    %c16 = arith.constant 16 : index
    %83 = vector.load %arg7[%c0_20, %c16] : memref<2x32xf32, #tpu.memory_space<vmem>>, vector<2x16xf32>
    tpu.vector_store %arg7[%c0_20, %c16], %81 {strides = array<i32>} : memref<2x32xf32, #tpu.memory_space<vmem>>, vector<2x16xf32>,
    return
  }
  func.func @transform_0(%arg0: i32) -> (i32, i32) {
    %c0_i32 = arith.constant 0 : i32
    %c0_i32_0 = arith.constant 0 : i32
    %c0_i32_1 = arith.constant 0 : i32
    return %c0_i32, %c0_i32_0 : i32, i32
  }
  func.func @transform_1(%arg0: i32) -> i32 {
    %c0_i32 = arith.constant 0 : i32
    %c0_i32_0 = arith.constant 0 : i32
    return %c0_i32 : i32
  }
  func.func @transform_2(%arg0: i32) -> (i32, i32) {
    %c0_i32 = arith.constant 0 : i32
    %c0_i32_0 = arith.constant 0 : i32
    return %arg0, %c0_i32 : i32, i32
  }
  func.func @transform_3(%arg0: i32) -> (i32, i32) {
    %c0_i32 = arith.constant 0 : i32
    %c0_i32_0 = arith.constant 0 : i32
    return %arg0, %c0_i32 : i32, i32
  }
  func.func @transform_4(%arg0: i32) -> (i32, i32) {
    %c0_i32 = arith.constant 0 : i32
    %c0_i32_0 = arith.constant 0 : i32
    return %arg0, %c0_i32 : i32, i32
  }
  func.func @transform_5(%arg0: i32) -> (i32, i32) {
    %c0_i32 = arith.constant 0 : i32
    %c0_i32_0 = arith.constant 0 : i32
    return %arg0, %c0_i32 : i32, i32
  }
  func.func @transform_6(%arg0: i32) -> (i32, i32) {
    %c0_i32 = arith.constant 0 : i32
    %c0_i32_0 = arith.constant 0 : i32
    return %arg0, %c0_i32 : i32, i32
  }
}

</mosaic_0001>

<llo_original>
// kernel: tpu_custom_call.1
$region0: #{tpu_custom_call.1}
  #allocation0 [shape = 'u32[]', space=smem, size = 0x4, offset = 0x4, fixed_abs, tag = 'smem constant byte address 0x4 - core index']
  #allocation1 [shape = 'u32[144,128]{1,0:T(1,128)}', space=vmem, size = 0x12000, scoped, tag = 'internal scratch']
  #allocation2 [shape = 'f32[1]{0:T(128)S(6)}', space=smem, size = 0x200, scoped, tag = 'scoped memory for tpu_custom_call.1']
  %s0 = inlined_call_operand.vmem [shape: f32[1,32], index: 0, kind: input, shape index: {}]
  %s1 = inlined_call_operand.<no memory space> [shape: f32[1], index: 1, kind: input, shape index: {}]
  %s2 = inlined_call_operand.vmem [shape: f32[2,32], index: 2, kind: input, shape index: {}]
  %s3 = inlined_call_operand.vmem [shape: f32[2,8], index: 3, kind: input, shape index: {}]
  %s4 = inlined_call_operand.vmem [shape: f32[2,16], index: 4, kind: input, shape index: {}]
  %s5 = inlined_call_operand.vmem [shape: f32[2,128], index: 5, kind: input, shape index: {}]
  %s6 = inlined_call_operand.hbm [shape: f32[2,32], index: 6, kind: output, shape index: {}]
  %s7 = sld [smem:[#allocation0]]
  $region34: #{tpu_custom_call.1} parent=0
    _
  %s9 = ssub.s32 1, %s7
  %s10 = scalar_select 0, %s9, %s7
  %11 = sst [smem:[#allocation2]] %s1
  $region1: #{tpu_custom_call.1} parent=0
    #allocation3 [shape = 'u8[1024]{0}', space=vmem, size = 0x400, scoped, tag = 'output window, operand 0, single buffered']
    #allocation4 [shape = 's32[1]{0}', space=sflag, size = 0x4, scoped, tag = 'scoped memory for tpu_custom_call.1']
    %12 = vsyncpa [#allocation4], 0
    // Predicated region
    $region2: #{tpu_custom_call.1} parent=1 // pred_check
      _
    $region3: #{tpu_custom_call.1} parent=1 // pred_check_branch
      %14 = sbr.rel (0) target = $region5
    $region4: #{tpu_custom_call.1} parent=1 // pred_region
      _
    $region5: #{tpu_custom_call.1} parent=1 // pred_fallthru
      _
    // Predicated region
    $region6: #{tpu_custom_call.1} parent=1 // pred_check
      _
    $region7: #{tpu_custom_call.1} parent=1 // pred_check_branch
      %16 = sbr.rel (0) target = $region9
    $region8: #{tpu_custom_call.1} parent=1 // pred_region
      _
    $region9: #{tpu_custom_call.1} parent=1 // pred_fallthru
      _
    // Predicated region
    $region10: #{tpu_custom_call.1} parent=1 // pred_check
      _
    $region11: #{tpu_custom_call.1} parent=1 // pred_check_branch
      %18 = sbr.rel (0) target = $region13
    $region12: #{tpu_custom_call.1} parent=1 // pred_region
      _
    $region13: #{tpu_custom_call.1} parent=1 // pred_fallthru
      _
    // Predicated region
    $region14: #{tpu_custom_call.1} parent=1 // pred_check
      _
    $region15: #{tpu_custom_call.1} parent=1 // pred_check_branch
      %20 = sbr.rel (0) target = $region17
    $region16: #{tpu_custom_call.1} parent=1 // pred_region
      _
    $region17: #{tpu_custom_call.1} parent=1 // pred_fallthru
      _
    // Predicated region
    $region18: #{tpu_custom_call.1} parent=1 // pred_check
      _
    $region19: #{tpu_custom_call.1} parent=1 // pred_check_branch
      %22 = sbr.rel (0) target = $region21
    $region20: #{tpu_custom_call.1} parent=1 // pred_region
      _
    $region21: #{tpu_custom_call.1} parent=1 // pred_fallthru
      _
    // Predicated region
    $region22: #{tpu_custom_call.1} parent=1 // pred_check
      _
    $region23: #{tpu_custom_call.1} parent=1 // pred_check_branch
      %24 = sbr.rel (0) target = $region25
    $region24: #{tpu_custom_call.1} parent=1 // pred_region
      _
    $region25: #{tpu_custom_call.1} parent=1 // pred_fallthru
      _
    %v25 = vld [vmem:[%s2] sm:$0x3]
    %v26 = vld [vmem:[%s0] sm:$0x1]
    %v28 = vlaneseq
    %v29 = vshrl.u32 %v28, 7
    %v30 = vsub.s32 0, %v29
    %v31 = vrot.slane %v26, %v30
    %v33 = vmul.f32 %v25, %v31
    %vm34 = vcmask 254976
    %v35 = vsel %vm34, %v33, 0.0
    %36 = vadd.xlane.f32.xlu0 %v35
    %v37 = vpop.xlane.xlu0 %36
    %s38 = sld [smem:[#allocation2]]
    %v39 = vstv %s38
    %v40 = vadd.f32 %v37, %v39
    %v41 = vmul.f32 %v40, 0.5
    %v42 = vtanh.pop %v41
    %v43 = vmul.f32 %v42, 0.5
    %v44 = vadd.f32 %v43, 0.5
    %v45 = vld [vmem:[%s3] sm:$0x3]
    %vm46 = vcmask 58368
    %v47 = vsel %vm46, %v45, -inf
    %48 = vmax.xlane.f32.xlu0 %v47
    %v49 = vpop.xlane.xlu0 %48
    %v50 = vsub.f32 %v45, %v49
    %v51 = vmul.f32 %v50, 1.442695
    %v52 = vpow.pop %v51
    %v53 = vsel %vm46, %v52, 0.0
    %54 = vadd.xlane.f32.xlu0 %v53
    %v55 = vpop.xlane.xlu0 %54
    %v56 = vrcp.pop %v55
    %v57 = vmul.f32 %v52, %v56
    %v58 = vld [vmem:[%s4] sm:$0x3]
    %vm59 = vcmask 123904
    %v60 = vsel %vm59, %v58, -inf
    %61 = vmax.xlane.f32.xlu0 %v60
    %v62 = vpop.xlane.xlu0 %61
    %v63 = vsub.f32 %v58, %v62
    %v64 = vmul.f32 %v63, 1.442695
    %v65 = vpow.pop %v64
    %v66 = vsel %vm59, %v65, 0.0
    %67 = vadd.xlane.f32.xlu0 %v66
    %v68 = vpop.xlane.xlu0 %67
    %v69 = vrcp.pop %v68
    %v70 = vmul.f32 %v65, %v69
    %v71 = vmul.f32 %v70, %v44
    %v72 = vld [vmem:[%s5] sm:$0x3]
    %74 = vset.pattern.permute.xlu0 0
    %75 = vperm.xlu0 %74, %v57
    %v76 = vpop.permute.xlu0 %75
    %v78 = vmul.f32 %v76, %v72
    %79 = vset.pattern.permute.xlu0 1
    %80 = vperm.xlu0 %79, %v57
    %v81 = vpop.permute.xlu0 %80
    %v83 = vmul.f32 %v81, %v72
    %85 = vrot.lane.b32.xlu0 %v83, 112
    %v86 = vpop.permute.xlu0 %85
    %v88 = vadd.f32 %v78, %v86
    %89 = vset.pattern.permute.xlu0 2
    %90 = vperm.xlu0 %89, %v57
    %v91 = vpop.permute.xlu0 %90
    %v93 = vmul.f32 %v91, %v72
    %95 = vrot.lane.b32.xlu0 %v93, 96
    %v96 = vpop.permute.xlu0 %95
    %v98 = vadd.f32 %v88, %v96
    %99 = vset.pattern.permute.xlu0 3
    %100 = vperm.xlu0 %99, %v57
    %v101 = vpop.permute.xlu0 %100
    %v103 = vmul.f32 %v101, %v72
    %105 = vrot.lane.b32.xlu0 %v103, 80
    %v106 = vpop.permute.xlu0 %105
    %v108 = vadd.f32 %v98, %v106
    %109 = vset.pattern.permute.xlu0 4
    %110 = vperm.xlu0 %109, %v57
    %v111 = vpop.permute.xlu0 %110
    %v113 = vmul.f32 %v111, %v72
    %115 = vrot.lane.b32.xlu0 %v113, 64
    %v116 = vpop.permute.xlu0 %115
    %v118 = vadd.f32 %v108, %v116
    %119 = vset.pattern.permute.xlu0 5
    %120 = vperm.xlu0 %119, %v57
    %v121 = vpop.permute.xlu0 %120
    %v123 = vmul.f32 %v121, %v72
    %125 = vrot.lane.b32.xlu0 %v123, 48
    %v126 = vpop.permute.xlu0 %125
    %v128 = vadd.f32 %v118, %v126
    %129 = vset.pattern.permute.xlu0 6
    %130 = vperm.xlu0 %129, %v57
    %v131 = vpop.permute.xlu0 %130
    %v133 = vmul.f32 %v131, %v72
    %135 = vrot.lane.b32.xlu0 %v133, 32
    %v136 = vpop.permute.xlu0 %135
    %v138 = vadd.f32 %v128, %v136
    %139 = vset.pattern.permute.xlu0 7
    %140 = vperm.xlu0 %139, %v57
    %v141 = vpop.permute.xlu0 %140
    %v143 = vmul.f32 %v141, %v72
    %145 = vrot.lane.b32.xlu0 %v143, 16
    %v146 = vpop.permute.xlu0 %145
    %v148 = vadd.f32 %v138, %v146
    %v149 = vsub.f32 1.0, %v44
    %v150 = vmul.f32 %v148, %v149
    %151 = vst.msk [vmem:[#allocation3] sm:$0x3] %vm59, %v71
    %153 = vrot.lane.b32.xlu0 %v150, 16
    %v154 = vpop.permute.xlu0 %153
    %vm156 = vcmask 255104
    %157 = vst.msk [vmem:[#allocation3] sm:$0x3] %vm156, %v154
    // Predicated region
    $region26: #{tpu_custom_call.1} parent=1 // pred_check
      _
    $region27: #{tpu_custom_call.1} parent=1 // pred_check_branch
      %159 = sbr.rel (0) target = $region29
    $region28: #{tpu_custom_call.1} parent=1 // pred_region
      %s161 = ssub.s32 32, 32
      %162 = vsyncadd [#allocation4], %s161
      %s164 = sshll.u32 [#allocation3], 4
      %s165 = int_to_ptr.vmem [resolvable:$true] %s164
      %167 = dma.vmem_to_hbm [thread:$0]  %s165, 32, %s6, [#allocation4]
    $region29: #{tpu_custom_call.1} parent=1 // pred_fallthru
      _
    // Predicated region
    $region30: #{tpu_custom_call.1} parent=1 // pred_check
      _
    $region31: #{tpu_custom_call.1} parent=1 // pred_check_branch
      %169 = sbr.rel (0) target = $region33
    $region32: #{tpu_custom_call.1} parent=1 // pred_region
      %170 = dma.done [#allocation4], 32
    $region33: #{tpu_custom_call.1} parent=1 // pred_fallthru
      _
    %171 = vsyncpa [#allocation4], 1

</llo_original>
